<compile_context>
chip_gen: v5e
topology: v5e:2x2
jax: 0.10.0
libtpu: 0.0.40
codegen_flags: <defaults>
</compile_context>

<pallas_src>
import jax
import jax.numpy as jnp
from jax.experimental import pallas as pl
from jax.experimental.pallas import tpu as pltpu

IN_FEATURES = 10
OUT_FEATURES = 1


def linear_kernel(x_ref, w_ref, b_ref, o_ref):
    # x_ref: (B_tile, K) VMEM, w_ref: (1, K) VMEM, b_ref: (1, 1) SMEM,
    # o_ref: (B_tile, 1) VMEM.
    prod = x_ref[...] * w_ref[...]                      # VPU broadcast multiply
    acc = jnp.sum(prod, axis=-1, keepdims=True)         # XLU cross-lane reduce
    o_ref[...] = (acc + b_ref[0, 0]).astype(o_ref.dtype)


def _linear_single(x, w_row, b_s):
    """Single-shot (no grid) path for small batches."""
    B = x.shape[0]
    return pl.pallas_call(
        linear_kernel,
        out_shape=jax.ShapeDtypeStruct((B, OUT_FEATURES), x.dtype),
        in_specs=[
            pl.BlockSpec(memory_space=pltpu.MemorySpace.VMEM),   # x  (B, 10)
            pl.BlockSpec(memory_space=pltpu.MemorySpace.VMEM),   # w  (1, 10)
            pl.BlockSpec(memory_space=pltpu.MemorySpace.SMEM),   # b  (1, 1) scalar
        ],
        out_specs=pl.BlockSpec(memory_space=pltpu.MemorySpace.VMEM),
    )(x, w_row, b_s)


def _linear_tiled(x, w_row, b_s, batch_tile):
    """Batch-tiled path for large B: W/b resident, batch axis parallel."""
    B = x.shape[0]
    grid = (pl.cdiv(B, batch_tile),)
    return pl.pallas_call(
        linear_kernel,
        out_shape=jax.ShapeDtypeStruct((B, OUT_FEATURES), x.dtype),
        grid=grid,
        in_specs=[
            pl.BlockSpec((batch_tile, IN_FEATURES), lambda i: (i, 0)),
            pl.BlockSpec((1, IN_FEATURES), lambda i: (0, 0)),      # resident W
            pl.BlockSpec(memory_space=pltpu.MemorySpace.SMEM),      # scalar bias
        ],
        out_specs=pl.BlockSpec((batch_tile, OUT_FEATURES), lambda i: (i, 0)),
        compiler_params=pltpu.CompilerParams(
            dimension_semantics=("parallel",),   # 2-TC split on v7x
        ),
    )(x, w_row, b_s)


def linear_pallas(x, w, b, *, batch_tile=512):
    """x: (B, 10) f32, w: (10, 1) f32, b: (1,) or (1, 1) f32 -> (B, 1) f32."""
    B = x.shape[0]
    w_row = w.reshape(1, IN_FEATURES).astype(x.dtype)   # row-vector layout for VPU
    b_s = b.reshape(1, 1).astype(x.dtype)
    if B >= batch_tile and B % batch_tile == 0:
        return _linear_tiled(x, w_row, b_s, batch_tile)
    return _linear_single(x, w_row, b_s)


if __name__ == "__main__":
    key = jax.random.PRNGKey(0)
    k_x, k_w, k_b, k_xl = jax.random.split(key, 4)

    # Deterministic parameter init mimicking nn.Linear default:
    # U(-1/sqrt(in_features), 1/sqrt(in_features))
    bound = 1.0 / jnp.sqrt(jnp.float32(IN_FEATURES))
    w = jax.random.uniform(k_w, (IN_FEATURES, OUT_FEATURES),
                           minval=-bound, maxval=bound, dtype=jnp.float32)
    b = jax.random.uniform(k_b, (1, OUT_FEATURES),
                           minval=-bound, maxval=bound, dtype=jnp.float32)

    # Small batch (matches the module's expected input rank): (8, 10)
    x = jax.random.normal(k_x, (8, IN_FEATURES), dtype=jnp.float32)
    out = linear_pallas(x, w, b)
    jax.block_until_ready(out)
    ref = x @ w + b
    assert out.shape == (8, OUT_FEATURES)
    assert jnp.allclose(out, ref, atol=1e-5, rtol=1e-5)

    # Large batch exercises the tiled / megacore-parallel path.
    x_large = jax.random.normal(k_xl, (1024, IN_FEATURES), dtype=jnp.float32)
    out_large = linear_pallas(x_large, w, b)
    jax.block_until_ready(out_large)
    ref_large = x_large @ w + b
    assert out_large.shape == (1024, OUT_FEATURES)
    assert jnp.allclose(out_large, ref_large, atol=1e-5, rtol=1e-5)

    print("KERNEL_OK")
</pallas_src>

<mosaic_0001>
module attributes {stable_mosaic.version = 11 : i64} {
  func.func @linear_kernel(%arg0: memref<8x10xf32, #tpu.memory_space<vmem>>, %arg1: memref<1x10xf32, #tpu.memory_space<vmem>>, %arg2: memref<1x1xf32, #tpu.memory_space<smem>>, %arg3: memref<8x1xf32, #tpu.memory_space<vmem>>) attributes {dimension_semantics = [], scalar_prefetch = 0 : i64, scratch_operands = 0 : i64, tpu.core_type = #tpu.core_type<tc>} {
    %c0 = arith.constant 0 : index
    %c0_0 = arith.constant 0 : index
    %0 = vector.load %arg0[%c0, %c0_0] : memref<8x10xf32, #tpu.memory_space<vmem>>, vector<8x10xf32>
    %c0_1 = arith.constant 0 : index
    %c0_2 = arith.constant 0 : index
    %1 = vector.load %arg1[%c0_1, %c0_2] : memref<1x10xf32, #tpu.memory_space<vmem>>, vector<1x10xf32>
    %2 = vector.broadcast %1 : vector<1x10xf32> to vector<8x10xf32>
    %3 = arith.mulf %0, %2 : vector<8x10xf32>
    %cst = arith.constant dense<0.000000e+00> : vector<8xf32>
    %4 = vector.multi_reduction <add>, %3, %cst [1] : vector<8x10xf32> to vector<8xf32>
    %5 = vector.shape_cast %4 : vector<8xf32> to vector<8x1xf32>
    %c0_3 = arith.constant 0 : index
    %c0_4 = arith.constant 0 : index
    %6 = memref.load %arg2[%c0_3, %c0_4] : memref<1x1xf32, #tpu.memory_space<smem>>
    %7 = vector.broadcast %6 : f32 to vector<8x1xf32>
    %8 = arith.addf %5, %7 : vector<8x1xf32>
    %c0_5 = arith.constant 0 : index
    %c0_6 = arith.constant 0 : index
    %9 = vector.load %arg3[%c0_5, %c0_6] : memref<8x1xf32, #tpu.memory_space<vmem>>, vector<8x1xf32>
    tpu.vector_store %arg3[%c0_5, %c0_6], %8 {strides = array<i32>} : memref<8x1xf32, #tpu.memory_space<vmem>>, vector<8x1xf32>,
    return
  }
}

</mosaic_0001>

<llo_original>
// kernel: tpu_custom_call.1
$region0: #{tpu_custom_call.1}
  #allocation0 [shape = 'u32[]', space=smem, size = 0x4, offset = 0x4, fixed_abs, tag = 'smem constant byte address 0x4 - core index']
  #allocation1 [shape = 'u32[72,128]{1,0:T(1,128)}', space=vmem, size = 0x9000, scoped, tag = 'internal scratch']
  #allocation2 [shape = 'f32[1,1]{1,0:T(1,128)S(6)}', space=smem, size = 0x200, scoped, tag = 'scoped memory for tpu_custom_call.1']
  %s0 = inlined_call_operand.hbm [shape: f32[8,10], index: 0, kind: input, shape index: {}]
  %s1 = inlined_call_operand.vmem [shape: f32[1,10], index: 1, kind: input, shape index: {}]
  %s2 = inlined_call_operand.<no memory space> [shape: f32[1,1], index: 2, kind: input, shape index: {}]
  %s3 = inlined_call_operand.vmem [shape: f32[8,1], index: 3, kind: output, shape index: {}]
  %s4 = sld [smem:[#allocation0]]
  $region26: #{tpu_custom_call.1} parent=0
    _
  %s6 = ssub.s32 1, %s4
  %s7 = scalar_select 0, %s6, %s4
  %8 = sst [smem:[#allocation2]] %s2
  $region1: #{tpu_custom_call.1} parent=0
    #allocation3 [shape = 'u8[4096]{0}', space=vmem, size = 0x1000, scoped, tag = 'input window, operand 0, single buffered']
    #allocation4 [shape = 's32[1]{0}', space=sflag, size = 0x4, scoped, tag = 'scoped memory for tpu_custom_call.1']
    %9 = vsyncpa [#allocation4], 0
    // Predicated region
    $region2: #{tpu_custom_call.1} parent=1 // pred_check
      _
    $region3: #{tpu_custom_call.1} parent=1 // pred_check_branch
      %11 = sbr.rel (0) target = $region5
    $region4: #{tpu_custom_call.1} parent=1 // pred_region
      %13 = vsyncadd [#allocation4], 0
      %s15 = sshll.u32 %s0, 4
      %s16 = int_to_ptr.hbm [resolvable:$true] %s15
      %s17 = sshll.u32 [#allocation3], 4
      %s18 = int_to_ptr.vmem [resolvable:$true] %s17
      %20 = dma.hbm_to_vmem [thread:$0]  %s16, 128, %s18, [#allocation4]
    $region5: #{tpu_custom_call.1} parent=1 // pred_fallthru
      _
    // Predicated region
    $region6: #{tpu_custom_call.1} parent=1 // pred_check
      _
    $region7: #{tpu_custom_call.1} parent=1 // pred_check_branch
      %22 = sbr.rel (0) target = $region9
    $region8: #{tpu_custom_call.1} parent=1 // pred_region
      _
    $region9: #{tpu_custom_call.1} parent=1 // pred_fallthru
      _
    // Predicated region
    $region10: #{tpu_custom_call.1} parent=1 // pred_check
      _
    $region11: #{tpu_custom_call.1} parent=1 // pred_check_branch
      %24 = sbr.rel (0) target = $region13
    $region12: #{tpu_custom_call.1} parent=1 // pred_region
      _
    $region13: #{tpu_custom_call.1} parent=1 // pred_fallthru
      _
    // Predicated region
    $region14: #{tpu_custom_call.1} parent=1 // pred_check
      _
    $region15: #{tpu_custom_call.1} parent=1 // pred_check_branch
      %26 = sbr.rel (0) target = $region17
    $region16: #{tpu_custom_call.1} parent=1 // pred_region
      %28 = dma.done [#allocation4], 128
    $region17: #{tpu_custom_call.1} parent=1 // pred_fallthru
      _
    %v29 = vld [vmem:[#allocation3] sm:$0xff]
    %v30 = vld [vmem:[%s1] sm:$0x1]
    %v32 = vperm.slane %v30, 0
    %v34 = vmul.f32 %v29, %v32
    %vm35 = vcmask 80896
    %v36 = vsel %vm35, %v34, 0.0
    %37 = vadd.xlane.f32.xlu0 %v36
    %v38 = vpop.xlane.xlu0 %37
    %s39 = sld [smem:[#allocation2]]
    %v40 = vstv %s39
    %v41 = vadd.f32 %v38, %v40
    %vm42 = vcmask 7168
    %43 = vst.msk [vmem:[%s3] sm:$0xff] %vm42, %v41
    // Predicated region
    $region18: #{tpu_custom_call.1} parent=1 // pred_check
      _
    $region19: #{tpu_custom_call.1} parent=1 // pred_check_branch
      %45 = sbr.rel (0) target = $region21
    $region20: #{tpu_custom_call.1} parent=1 // pred_region
      _
    $region21: #{tpu_custom_call.1} parent=1 // pred_fallthru
      _
    // Predicated region
    $region22: #{tpu_custom_call.1} parent=1 // pred_check
      _
    $region23: #{tpu_custom_call.1} parent=1 // pred_check_branch
      %47 = sbr.rel (0) target = $region25
    $region24: #{tpu_custom_call.1} parent=1 // pred_region
      _
    $region25: #{tpu_custom_call.1} parent=1 // pred_fallthru
      _
    %48 = vsyncpa [#allocation4], 1

</llo_original>
